<compile_context>
chip_gen: v7x
topology: tpu7x:2x2x1
jax: 0.10.0
libtpu: 0.0.40
codegen_flags: <defaults>
</compile_context>

<pallas_src>
import jax
import jax.numpy as jnp
from jax.experimental import pallas as pl
from jax.experimental.pallas import tpu as pltpu


def _se_kernel(x_ref, w1_ref, b1_ref, w2_ref, b2_ref, o_ref):
    # x_ref block: (Nb, HW, C); C on lanes, HW on sublanes.
    hw = x_ref.shape[1]
    # per-image global average pool: f32 sum over the spatial axis / true HW.
    m = jnp.sum(x_ref[...].astype(jnp.float32), axis=1) * (1.0 / hw)      # (Nb, C)
    # conv_reduce (1x1): (Nb, C) @ (C, Cs) + (1, Cs)
    s1 = jnp.dot(m, w1_ref[...], preferred_element_type=jnp.float32) + b1_ref[...]
    s1 = s1 * jax.nn.sigmoid(s1)                                          # SiLU
    # conv_expand (1x1): (Nb, Cs) @ (Cs, C) + (1, C)
    s2 = jnp.dot(s1, w2_ref[...], preferred_element_type=jnp.float32) + b2_ref[...]
    scale = jax.nn.sigmoid(s2)                                            # (Nb, C)
    # rescale; re-read x_ref so the full tile isn't kept live across the GEMMs.
    o_ref[...] = (x_ref[...].astype(jnp.float32) * scale[:, None, :]).astype(o_ref.dtype)


def _pick_block_batch(n, hw, c, itemsize, budget_bytes=3 << 20):
    """Images per grid step: biggest tile <= ~3 MiB, but keep the grid >= 2."""
    per_image = hw * c * itemsize
    nb = max(1, budget_bytes // per_image)
    nb = min(nb, n)
    if n >= 2:
        nb = min(nb, pl.cdiv(n, 2))   # v7x: 2 TensorCores want >= 2 grid steps
    return int(nb)


def squeeze_excite(x, w_reduce, b_reduce, w_expand, b_expand, *, block_batch=None):
    """SqueezeExcite forward. x: (N, C, H, W) NCHW like PyTorch. Returns NCHW."""
    N, C, H, W = x.shape
    Cs = w_reduce.shape[0]
    HW = H * W
    itemsize = jnp.dtype(x.dtype).itemsize

    nb = block_batch if block_batch is not None else _pick_block_batch(N, HW, C, itemsize)
    n_steps = int(pl.cdiv(N, nb))
    Np = n_steps * nb

    # Channels-last presentation: (N, HW, C), C on lanes.
    # TODO(synk): in a fully channels-last EfficientNetV2 this transpose is free
    # (activations already live as NHWC); here it is wrapper-side layout
    # plumbing to keep the PyTorch NCHW interface.
    x3 = jnp.transpose(x, (0, 2, 3, 1)).reshape(N, HW, C)
    if Np != N:
        x3 = jnp.pad(x3, ((0, Np - N), (0, 0), (0, 0)))

    # Parameters in the orientation the kernel consumes (f32, lane-major biases).
    w1t = jnp.transpose(w_reduce).astype(jnp.float32)   # (C, Cs)
    w2t = jnp.transpose(w_expand).astype(jnp.float32)   # (Cs, C)
    b1 = b_reduce.reshape(1, Cs).astype(jnp.float32)
    b2 = b_expand.reshape(1, C).astype(jnp.float32)

    cost = pl.CostEstimate(
        flops=4 * Np * C * Cs,
        transcendentals=Np * (2 * Cs + C),
        bytes_accessed=2 * Np * HW * C * itemsize + (2 * C * Cs + C + Cs) * 4,
    )

    out = pl.pallas_call(
        _se_kernel,
        out_shape=jax.ShapeDtypeStruct((Np, HW, C), x.dtype),
        grid_spec=pltpu.PrefetchScalarGridSpec(
            num_scalar_prefetch=0,
            grid=(n_steps,),
            in_specs=[
                pl.BlockSpec((nb, HW, C), lambda b: (b, 0, 0)),  # x tile (Nb images)
                pl.BlockSpec((C, Cs), lambda b: (0, 0)),         # W_reduce^T (full)
                pl.BlockSpec((1, Cs), lambda b: (0, 0)),         # b_reduce (lane-major)
                pl.BlockSpec((Cs, C), lambda b: (0, 0)),         # W_expand^T (full)
                pl.BlockSpec((1, C), lambda b: (0, 0)),          # b_expand (lane-major)
            ],
            out_specs=pl.BlockSpec((nb, HW, C), lambda b: (b, 0, 0)),
        ),
        compiler_params=pltpu.CompilerParams(
            dimension_semantics=("parallel",),
            vmem_limit_bytes=32 << 20,
        ),
        cost_estimate=cost,
    )(x3, w1t, b1, w2t, b2)

    out = out[:N].reshape(N, H, W, C)
    return jnp.transpose(out, (0, 3, 1, 2))


def _reference(x, w_reduce, b_reduce, w_expand, b_expand):
    """Pure-JAX reference reproducing the PyTorch forward (f32 compute)."""
    xf = x.astype(jnp.float32)
    m = xf.mean(axis=(2, 3), keepdims=True)                              # (N, C, 1, 1)
    s = jnp.einsum('oc,nchw->nohw', w_reduce, m) + b_reduce[None, :, None, None]
    s = s * jax.nn.sigmoid(s)                                            # SiLU
    s = jnp.einsum('oc,nchw->nohw', w_expand, s) + b_expand[None, :, None, None]
    s = jax.nn.sigmoid(s)
    return (s * xf).astype(x.dtype)


if __name__ == "__main__":
    # SqueezeExcite(input_c=32, expand_c=128, se_ratio=0.25) -> squeeze_c = 8.
    input_c, expand_c, se_ratio = 32, 128, 0.25
    squeeze_c = int(input_c * se_ratio)
    N, H, W = 8, 14, 14            # HW = 196: realistic EfficientNetV2 spatial size

    key = jax.random.PRNGKey(0)
    kx, k1, k2, k3, k4 = jax.random.split(key, 5)

    x = jax.random.normal(kx, (N, expand_c, H, W), dtype=jnp.float32)
    w_reduce = 0.1 * jax.random.normal(k1, (squeeze_c, expand_c), dtype=jnp.float32)
    b_reduce = 0.1 * jax.random.normal(k2, (squeeze_c,), dtype=jnp.float32)
    w_expand = 0.1 * jax.random.normal(k3, (expand_c, squeeze_c), dtype=jnp.float32)
    b_expand = 0.1 * jax.random.normal(k4, (expand_c,), dtype=jnp.float32)

    # f32 path (matches the PyTorch module up to FP ordering).
    out = jax.block_until_ready(
        squeeze_excite(x, w_reduce, b_reduce, w_expand, b_expand))
    ref = _reference(x, w_reduce, b_reduce, w_expand, b_expand)
    assert out.shape == (N, expand_c, H, W)
    assert jnp.allclose(out, ref, atol=1e-5, rtol=1e-5), "f32 mismatch vs reference"

    # bf16-I/O path: halves HBM traffic on this memory-bound kernel; compute
    # (mean accumulation, GEMMs, sigmoids) stays in f32 inside the kernel.
    xb = x.astype(jnp.bfloat16)
    out_b = jax.block_until_ready(
        squeeze_excite(xb, w_reduce, b_reduce, w_expand, b_expand))
    ref_b = _reference(xb, w_reduce, b_reduce, w_expand, b_expand)
    assert out_b.dtype == jnp.bfloat16
    assert jnp.allclose(out_b.astype(jnp.float32), ref_b.astype(jnp.float32),
                        atol=5e-2, rtol=5e-2), "bf16 mismatch vs reference"

    print("KERNEL_OK")
</pallas_src>

<mosaic_0001>
module attributes {stable_mosaic.version = 11 : i64} {
  func.func @_se_kernel(%arg0: i32, %arg1: memref<4x196x128xf32, #tpu.memory_space<vmem>>, %arg2: memref<128x8xf32, #tpu.memory_space<vmem>>, %arg3: memref<1x8xf32, #tpu.memory_space<vmem>>, %arg4: memref<8x128xf32, #tpu.memory_space<vmem>>, %arg5: memref<1x128xf32, #tpu.memory_space<vmem>>, %arg6: memref<4x196x128xf32, #tpu.memory_space<vmem>>) attributes {dimension_semantics = [#tpu.dimension_semantics<parallel>], iteration_bounds = array<i64: 2>, scalar_prefetch = 0 : i64, scratch_operands = 0 : i64, tpu.core_type = #tpu.core_type<tc>, window_params = [{transform_indices = @transform_0, window_bounds = array<i64: 4, 196, 128>}, {pipeline_mode = #tpu.pipeline_mode<synchronous>, transform_indices = @transform_1, window_bounds = array<i64: 128, 8>}, {pipeline_mode = #tpu.pipeline_mode<synchronous>, transform_indices = @transform_2, window_bounds = array<i64: 1, 8>}, {pipeline_mode = #tpu.pipeline_mode<synchronous>, transform_indices = @transform_3, window_bounds = array<i64: 8, 128>}, {pipeline_mode = #tpu.pipeline_mode<synchronous>, transform_indices = @transform_4, window_bounds = array<i64: 1, 128>}, {transform_indices = @transform_5, window_bounds = array<i64: 4, 196, 128>}]} {
    %c0 = arith.constant 0 : index
    %c0_0 = arith.constant 0 : index
    %c0_1 = arith.constant 0 : index
    %0 = vector.load %arg1[%c0, %c0_0, %c0_1] : memref<4x196x128xf32, #tpu.memory_space<vmem>>, vector<4x196x128xf32>
    %cst = arith.constant dense<0.000000e+00> : vector<4x128xf32>
    %1 = vector.multi_reduction <add>, %0, %cst [1] : vector<4x196x128xf32> to vector<4x128xf32>
    %cst_2 = arith.constant 0.00510204071 : f32
    %2 = vector.broadcast %cst_2 : f32 to vector<4x128xf32>
    %3 = arith.mulf %1, %2 : vector<4x128xf32>
    %c0_3 = arith.constant 0 : index
    %c0_4 = arith.constant 0 : index
    %4 = vector.load %arg2[%c0_3, %c0_4] : memref<128x8xf32, #tpu.memory_space<vmem>>, vector<128x8xf32>
    %cst_5 = arith.constant dense<0.000000e+00> : vector<4x8xf32>
    %5 = tpu.matmul %3, %4, %cst_5 {dimension_numbers = #tpu.dot_dimension_numbers<[1], [0], [0], [1], [0, 0, 1, 1], [], []>} : vector<4x128xf32>, vector<128x8xf32>, vector<4x8xf32> -> vector<4x8xf32>
    %c0_6 = arith.constant 0 : index
    %c0_7 = arith.constant 0 : index
    %6 = vector.load %arg3[%c0_6, %c0_7] : memref<1x8xf32, #tpu.memory_space<vmem>>, vector<1x8xf32>
    %7 = vector.broadcast %6 : vector<1x8xf32> to vector<4x8xf32>
    %8 = arith.addf %5, %7 : vector<4x8xf32>
    %9 = arith.negf %8 : vector<4x8xf32>
    %10 = math.exp %9 : vector<4x8xf32>
    %cst_8 = arith.constant 1.000000e+00 : f32
    %11 = vector.broadcast %cst_8 : f32 to vector<4x8xf32>
    %12 = arith.addf %11, %10 : vector<4x8xf32>
    %13 = arith.divf %11, %12 : vector<4x8xf32>
    %14 = arith.mulf %8, %13 : vector<4x8xf32>
    %c0_9 = arith.constant 0 : index
    %c0_10 = arith.constant 0 : index
    %15 = vector.load %arg4[%c0_9, %c0_10] : memref<8x128xf32, #tpu.memory_space<vmem>>, vector<8x128xf32>
    %cst_11 = arith.constant dense<0.000000e+00> : vector<4x128xf32>
    %16 = tpu.matmul %14, %15, %cst_11 {dimension_numbers = #tpu.dot_dimension_numbers<[1], [0], [0], [1], [0, 0, 1, 1], [], []>} : vector<4x8xf32>, vector<8x128xf32>, vector<4x128xf32> -> vector<4x128xf32>
    %c0_12 = arith.constant 0 : index
    %c0_13 = arith.constant 0 : index
    %17 = vector.load %arg5[%c0_12, %c0_13] : memref<1x128xf32, #tpu.memory_space<vmem>>, vector<1x128xf32>
    %18 = vector.broadcast %17 : vector<1x128xf32> to vector<4x128xf32>
    %19 = arith.addf %16, %18 : vector<4x128xf32>
    %20 = arith.negf %19 : vector<4x128xf32>
    %21 = math.exp %20 : vector<4x128xf32>
    %cst_14 = arith.constant 1.000000e+00 : f32
    %22 = vector.broadcast %cst_14 : f32 to vector<4x128xf32>
    %23 = arith.addf %22, %21 : vector<4x128xf32>
    %24 = arith.divf %22, %23 : vector<4x128xf32>
    %c0_15 = arith.constant 0 : index
    %c0_16 = arith.constant 0 : index
    %c0_17 = arith.constant 0 : index
    %25 = vector.load %arg1[%c0_15, %c0_16, %c0_17] : memref<4x196x128xf32, #tpu.memory_space<vmem>>, vector<4x196x128xf32>
    %26 = vector.shape_cast %24 : vector<4x128xf32> to vector<4x1x128xf32>
    %27 = vector.broadcast %26 : vector<4x1x128xf32> to vector<4x196x128xf32>
    %28 = arith.mulf %25, %27 : vector<4x196x128xf32>
    %c0_18 = arith.constant 0 : index
    %c0_19 = arith.constant 0 : index
    %c0_20 = arith.constant 0 : index
    %29 = vector.load %arg6[%c0_18, %c0_19, %c0_20] : memref<4x196x128xf32, #tpu.memory_space<vmem>>, vector<4x196x128xf32>
    tpu.vector_store %arg6[%c0_18, %c0_19, %c0_20], %28 {strides = array<i32>} : memref<4x196x128xf32, #tpu.memory_space<vmem>>, vector<4x196x128xf32>,
    return
  }
  func.func @transform_0(%arg0: i32) -> (i32, i32, i32) {
    %c0_i32 = arith.constant 0 : i32
    %c0_i32_0 = arith.constant 0 : i32
    %c0_i32_1 = arith.constant 0 : i32
    return %arg0, %c0_i32, %c0_i32_0 : i32, i32, i32
  }
  func.func @transform_1(%arg0: i32) -> (i32, i32) {
    %c0_i32 = arith.constant 0 : i32
    %c0_i32_0 = arith.constant 0 : i32
    %c0_i32_1 = arith.constant 0 : i32
    return %c0_i32, %c0_i32_0 : i32, i32
  }
  func.func @transform_2(%arg0: i32) -> (i32, i32) {
    %c0_i32 = arith.constant 0 : i32
    %c0_i32_0 = arith.constant 0 : i32
    %c0_i32_1 = arith.constant 0 : i32
    return %c0_i32, %c0_i32_0 : i32, i32
  }
  func.func @transform_3(%arg0: i32) -> (i32, i32) {
    %c0_i32 = arith.constant 0 : i32
    %c0_i32_0 = arith.constant 0 : i32
    %c0_i32_1 = arith.constant 0 : i32
    return %c0_i32, %c0_i32_0 : i32, i32
  }
  func.func @transform_4(%arg0: i32) -> (i32, i32) {
    %c0_i32 = arith.constant 0 : i32
    %c0_i32_0 = arith.constant 0 : i32
    %c0_i32_1 = arith.constant 0 : i32
    return %c0_i32, %c0_i32_0 : i32, i32
  }
  func.func @transform_5(%arg0: i32) -> (i32, i32, i32) {
    %c0_i32 = arith.constant 0 : i32
    %c0_i32_0 = arith.constant 0 : i32
    %c0_i32_1 = arith.constant 0 : i32
    return %arg0, %c0_i32, %c0_i32_0 : i32, i32, i32
  }
}

</mosaic_0001>

<llo_original>
// kernel: tpu_custom_call.1
$region0: #{tpu_custom_call.1}
  #allocation0 [shape = 'u32[]', space=smem, size = 0x4, offset = 0x4, fixed_abs, tag = 'smem constant byte address 0x4 - core index']
  #allocation1 [shape = 'u32[144,128]{1,0:T(1,128)}', space=vmem, size = 0x12000, scoped, tag = 'internal scratch']
  %s0 = inlined_call_operand.vmem [shape: f32[8,196,128], index: 0, kind: input, shape index: {}]
  %s1 = inlined_call_operand.vmem [shape: f32[128,8], index: 1, kind: input, shape index: {}]
  %s2 = inlined_call_operand.vmem [shape: f32[1,8], index: 2, kind: input, shape index: {}]
  %s3 = inlined_call_operand.vmem [shape: f32[8,128], index: 3, kind: input, shape index: {}]
  %s4 = inlined_call_operand.vmem [shape: f32[1,128], index: 4, kind: input, shape index: {}]
  %s5 = inlined_call_operand.vmem [shape: f32[8,196,128], index: 5, kind: output, shape index: {}]
  %s6 = sld [smem:[#allocation0]]
  $region53: #{tpu_custom_call.1} parent=0
    _
  %s8 = ssub.s32 1, %s6
  %s9 = scalar_select 0, %s8, %s6
  loop: start=0, step=1, limit=4
  $region2: #{tpu_custom_call.1} parent=0 // loop_pre_header
    _
  $region3: #{tpu_custom_call.1} parent=0 // loop_header
    %s11 = sphi 0, %s15
    %p12 = scmp.ge.s32.totalorder %s11, 4
    %s21 = sphi 0, %s23
    %s24 = sphi 0, %s21
    %s25 = sphi 0, %s24
    %s41 = sphi 0, %s25
    %s45 = sphi 0, %s45
    %s47 = sphi 0, %s45
    %s48 = sphi 0, %s47
    %s62 = sphi 0, %s48
    %s66 = sphi 0, %s66
    %s68 = sphi 0, %s66
    %s69 = sphi 0, %s68
    %s83 = sphi 0, %s69
    %s87 = sphi 0, %s87
    %s89 = sphi 0, %s87
    %s90 = sphi 0, %s89
    %s104 = sphi 0, %s90
    %s108 = sphi 0, %s108
    %s110 = sphi 0, %s108
    %s111 = sphi 0, %s110
    %s125 = sphi 0, %s111
    %s131 = sphi 0, %s133
    %s134 = sphi 0, %s131
    %s135 = sphi 0, %s134
    %s151 = sphi 0, %s135
  $region4: #{tpu_custom_call.1} parent=0 // loop_header_branch
    %14 = sbr.rel (%p12) target = $region8
  $region5: #{tpu_custom_call.1} parent=0 // loop_body
    %s16 = ssub.s32 %s11, 1
    %s17 = ssub.s32 %s11, 2
    %s18 = sadd.s32 %s11, 1
    %s19 = ssub.s32 %s11, %s18
    %p20 = scmp.eq.s32.totalorder %s19, 0
    %s22 = sadd.s32 %s21, 1
    %s23 = scalar_select %p20, %s21, %s22
    %p26 = pneg %p20
    %p27 = scmp.eq.s32.totalorder %s11, 1
    %p28 = por %p26, %p27
    %p29 = scmp.ne.s32.totalorder %s21, %s24
    %p30 = scmp.eq.s32.totalorder %s11, 0
    %p31 = por %p29, %p30
    %p32 = scmp.ne.s32.totalorder %s21, %s24
    %p33 = scmp.eq.s32.totalorder %s16, 1
    %p34 = por %p32, %p33
    %p35 = scmp.ne.s32.totalorder %s24, %s25
    %p36 = scmp.eq.s32.totalorder %s16, 0
    %p37 = por %p35, %p36
    %p38 = scmp.ne.s32.totalorder %s24, %s25
    %p39 = scmp.eq.s32.totalorder %s17, 1
    %p40 = por %p38, %p39
    %p42 = scmp.ne.s32.totalorder %s25, %s41
    %p43 = scmp.eq.s32.totalorder %s17, 0
    %p44 = por %p42, %p43
    %s46 = sadd.s32 %s45, 1
    %p49 = scmp.eq.s32.totalorder %s11, 1
    %p50 = scmp.ne.s32.totalorder %s45, %s47
    %p51 = scmp.eq.s32.totalorder %s11, 0
    %p52 = por %p50, %p51
    %p53 = scmp.ne.s32.totalorder %s45, %s47
    %p54 = scmp.eq.s32.totalorder %s16, 1
    %p55 = por %p53, %p54
    %p56 = scmp.ne.s32.totalorder %s47, %s48
    %p57 = scmp.eq.s32.totalorder %s16, 0
    %p58 = por %p56, %p57
    %p59 = scmp.ne.s32.totalorder %s47, %s48
    %p60 = scmp.eq.s32.totalorder %s17, 1
    %p61 = por %p59, %p60
    %p63 = scmp.ne.s32.totalorder %s48, %s62
    %p64 = scmp.eq.s32.totalorder %s17, 0
    %p65 = por %p63, %p64
    %s67 = sadd.s32 %s66, 1
    %p70 = scmp.eq.s32.totalorder %s11, 1
    %p71 = scmp.ne.s32.totalorder %s66, %s68
    %p72 = scmp.eq.s32.totalorder %s11, 0
    %p73 = por %p71, %p72
    %p74 = scmp.ne.s32.totalorder %s66, %s68
    %p75 = scmp.eq.s32.totalorder %s16, 1
    %p76 = por %p74, %p75
    %p77 = scmp.ne.s32.totalorder %s68, %s69
    %p78 = scmp.eq.s32.totalorder %s16, 0
    %p79 = por %p77, %p78
    %p80 = scmp.ne.s32.totalorder %s68, %s69
    %p81 = scmp.eq.s32.totalorder %s17, 1
    %p82 = por %p80, %p81
    %p84 = scmp.ne.s32.totalorder %s69, %s83
    %p85 = scmp.eq.s32.totalorder %s17, 0
    %p86 = por %p84, %p85
    %s88 = sadd.s32 %s87, 1
    %p91 = scmp.eq.s32.totalorder %s11, 1
    %p92 = scmp.ne.s32.totalorder %s87, %s89
    %p93 = scmp.eq.s32.totalorder %s11, 0
    %p94 = por %p92, %p93
    %p95 = scmp.ne.s32.totalorder %s87, %s89
    %p96 = scmp.eq.s32.totalorder %s16, 1
    %p97 = por %p95, %p96
    %p98 = scmp.ne.s32.totalorder %s89, %s90
    %p99 = scmp.eq.s32.totalorder %s16, 0
    %p100 = por %p98, %p99
    %p101 = scmp.ne.s32.totalorder %s89, %s90
    %p102 = scmp.eq.s32.totalorder %s17, 1
    %p103 = por %p101, %p102
    %p105 = scmp.ne.s32.totalorder %s90, %s104
    %p106 = scmp.eq.s32.totalorder %s17, 0
    %p107 = por %p105, %p106
    %s109 = sadd.s32 %s108, 1
    %p112 = scmp.eq.s32.totalorder %s11, 1
    %p113 = scmp.ne.s32.totalorder %s108, %s110
    %p114 = scmp.eq.s32.totalorder %s11, 0
    %p115 = por %p113, %p114
    %p116 = scmp.ne.s32.totalorder %s108, %s110
    %p117 = scmp.eq.s32.totalorder %s16, 1
    %p118 = por %p116, %p117
    %p119 = scmp.ne.s32.totalorder %s110, %s111
    %p120 = scmp.eq.s32.totalorder %s16, 0
    %p121 = por %p119, %p120
    %p122 = scmp.ne.s32.totalorder %s110, %s111
    %p123 = scmp.eq.s32.totalorder %s17, 1
    %p124 = por %p122, %p123
    %p126 = scmp.ne.s32.totalorder %s111, %s125
    %p127 = scmp.eq.s32.totalorder %s17, 0
    %p128 = por %p126, %p127
    %s129 = ssub.s32 %s11, %s18
    %p130 = scmp.eq.s32.totalorder %s129, 0
    %s132 = sadd.s32 %s131, 1
    %s133 = scalar_select %p130, %s131, %s132
    %p136 = pneg %p130
    %p137 = scmp.eq.s32.totalorder %s11, 1
    %p138 = por %p136, %p137
    %p139 = scmp.ne.s32.totalorder %s131, %s134
    %p140 = scmp.eq.s32.totalorder %s11, 0
    %p141 = por %p139, %p140
    %p142 = scmp.ne.s32.totalorder %s131, %s134
    %p143 = scmp.eq.s32.totalorder %s16, 1
    %p144 = por %p142, %p143
    %p145 = scmp.ne.s32.totalorder %s134, %s135
    %p146 = scmp.eq.s32.totalorder %s16, 0
    %p147 = por %p145, %p146
    %p148 = scmp.ne.s32.totalorder %s134, %s135
    %p149 = scmp.eq.s32.totalorder %s17, 1
    %p150 = por %p148, %p149
    %p152 = scmp.ne.s32.totalorder %s135, %s151
    %p153 = scmp.eq.s32.totalorder %s17, 0
    %p154 = por %p152, %p153
    %p155 = scmp.le.s32.totalorder 1, %s11
    %p156 = scmp.lt.s32.totalorder %s11, 3
    %p157 = pnand %p155, %p156
    %p158 = pneg %p157
    // Predicated region
    $region9: #{tpu_custom_call.1} parent=5 // pred_check
      _
    $region10: #{tpu_custom_call.1} parent=5 // pred_check_branch
      %160 = sbr.rel (%p157) target = $region12
    $region11: #{tpu_custom_call.1} parent=5 // pred_region
      %s161 = ssub.s32 %s11, 1
      // Predicated region
      $region13: #{tpu_custom_call.1} parent=11 // pred_check
        %p162 = pneg %p58
      $region14: #{tpu_custom_call.1} parent=11 // pred_check_branch
        %164 = sbr.rel (%p162) target = $region16
      $region15: #{tpu_custom_call.1} parent=11 // pred_region
        _
      $region16: #{tpu_custom_call.1} parent=11 // pred_fallthru
        _
      // Predicated region
      $region17: #{tpu_custom_call.1} parent=11 // pred_check
        %p165 = pneg %p79
      $region18: #{tpu_custom_call.1} parent=11 // pred_check_branch
        %167 = sbr.rel (%p165) target = $region20
      $region19: #{tpu_custom_call.1} parent=11 // pred_region
        _
      $region20: #{tpu_custom_call.1} parent=11 // pred_fallthru
        _
      // Predicated region
      $region21: #{tpu_custom_call.1} parent=11 // pred_check
        %p168 = pneg %p100
      $region22: #{tpu_custom_call.1} parent=11 // pred_check_branch
        %170 = sbr.rel (%p168) target = $region24
      $region23: #{tpu_custom_call.1} parent=11 // pred_region
        _
      $region24: #{tpu_custom_call.1} parent=11 // pred_fallthru
        _
      // Predicated region
      $region25: #{tpu_custom_call.1} parent=11 // pred_check
        %p171 = pneg %p121
      $region26: #{tpu_custom_call.1} parent=11 // pred_check_branch
        %173 = sbr.rel (%p171) target = $region28
      $region27: #{tpu_custom_call.1} parent=11 // pred_region
        _
      $region28: #{tpu_custom_call.1} parent=11 // pred_fallthru
        _
    $region12: #{tpu_custom_call.1} parent=5 // pred_fallthru
      _
    %p174 = scmp.lt.s32.totalorder %s11, 2
    // Predicated region
    $region29: #{tpu_custom_call.1} parent=5 // pred_check
      %p175 = pneg %p174
    $region30: #{tpu_custom_call.1} parent=5 // pred_check_branch
      %177 = sbr.rel (%p175) target = $region32
    $region31: #{tpu_custom_call.1} parent=5 // pred_region
      // Predicated region
      $region33: #{tpu_custom_call.1} parent=31 // pred_check
        %p178 = pneg %p31
      $region34: #{tpu_custom_call.1} parent=31 // pred_check_branch
        %180 = sbr.rel (%p178) target = $region36
      $region35: #{tpu_custom_call.1} parent=31 // pred_region
        %s181 = smul.u32 4, %s11
        %p182 = scmp.lt.s32.totalorder %s181, 7
        %s183 = scalar_select %p182, %s181, 7
        %s184 = smul.addr %s183, 25
        %s185 = smul.addr %s184, 8
        %s186 = scalar_lea.vmem %s0, %s185
        %s187 = smul.u32 4, %s11
      $region36: #{tpu_custom_call.1} parent=31 // pred_fallthru
        _
    $region32: #{tpu_custom_call.1} parent=5 // pred_fallthru
      _
    %p188 = scmp.le.s32.totalorder 1, %s11
    %p189 = scmp.lt.s32.totalorder %s11, 3
    %p190 = pnand %p188, %p189
    %p191 = pneg %p190
    // Predicated region
    $region37: #{tpu_custom_call.1} parent=5 // pred_check
      _
    $region38: #{tpu_custom_call.1} parent=5 // pred_check_branch
      %193 = sbr.rel (%p190) target = $region40
    $region39: #{tpu_custom_call.1} parent=5 // pred_region
      %s194 = ssub.s32 %s11, 1
      %s195 = smul.u32 4, %s16
      %p196 = scmp.lt.s32.totalorder %s195, 7
      %s197 = scalar_select %p196, %s195, 7
      %s198 = smul.addr %s197, 25
      %s199 = smul.addr %s198, 8
      %s200 = scalar_lea.vmem %s0, %s199
      %p201 = pneg %p37
      %p202 = pneg %p34
      %p203 = pneg %p58
      %p204 = pneg %p55
      %p205 = pneg %p79
      %p206 = pneg %p76
      %p207 = pneg %p100
      %p208 = pneg %p97
      %p209 = pneg %p121
      %p210 = pneg %p118
      %p211 = pneg %p147
      %p212 = pneg %p144
      %s213 = smul.u32 4, %s16
      %p214 = scmp.lt.s32.totalorder %s213, 7
      %s215 = scalar_select %p214, %s213, 7
      %s216 = smul.addr %s215, 25
      %s217 = smul.addr %s216, 8
      %s218 = scalar_lea.vmem %s5, %s217
      %s219 = smul.u32 4, %s16
      %p220 = scmp.lt.s32.totalorder %s219, 7
      %s221 = scalar_select %p220, %s219, 7
      %s222 = smul.addr %s221, 25
      %s223 = smul.addr %s222, 8
      %s224 = scalar_lea.vmem %s0, %s223
      %s225 = smul.u32 4, %s16
      %s226 = smul.u32 4, %s16
      %p227 = scmp.lt.s32.totalorder %s226, 7
      %s228 = scalar_select %p227, %s226, 7
      %s229 = smul.addr %s228, 25
      %s230 = smul.addr %s229, 8
      %s231 = scalar_lea.vmem %s5, %s230
      %s232 = smul.u32 4, %s16
      %v233 = vld [vmem:[%s224] sm:$0xff]
      %v234 = vld [vmem:[%s224 + $0x8] sm:$0xff]
      %v235 = vld [vmem:[%s224 + $0x10] sm:$0xff]
      %v236 = vld [vmem:[%s224 + $0x18] sm:$0xff]
      %v237 = vld [vmem:[%s224 + $0x20] sm:$0xff]
      %v238 = vld [vmem:[%s224 + $0x28] sm:$0xff]
      %v239 = vld [vmem:[%s224 + $0x30] sm:$0xff]
      %v240 = vld [vmem:[%s224 + $0x38] sm:$0xff]
      %v241 = vld [vmem:[%s224 + $0x40] sm:$0xff]
      %v242 = vld [vmem:[%s224 + $0x48] sm:$0xff]
      %v243 = vld [vmem:[%s224 + $0x50] sm:$0xff]
      %v244 = vld [vmem:[%s224 + $0x58] sm:$0xff]
      %v245 = vld [vmem:[%s224 + $0x60] sm:$0xff]
      %v246 = vld [vmem:[%s224 + $0x68] sm:$0xff]
      %v247 = vld [vmem:[%s224 + $0x70] sm:$0xff]
      %v248 = vld [vmem:[%s224 + $0x78] sm:$0xff]
      %v249 = vld [vmem:[%s224 + $0x80] sm:$0xff]
      %v250 = vld [vmem:[%s224 + $0x88] sm:$0xff]
      %v251 = vld [vmem:[%s224 + $0x90] sm:$0xff]
      %v252 = vld [vmem:[%s224 + $0x98] sm:$0xff]
      %v253 = vld [vmem:[%s224 + $0xa0] sm:$0xff]
      %v254 = vld [vmem:[%s224 + $0xa8] sm:$0xff]
      %v255 = vld [vmem:[%s224 + $0xb0] sm:$0xff]
      %v256 = vld [vmem:[%s224 + $0xb8] sm:$0xff]
      %v257 = vld [vmem:[%s224 + $0xc0] sm:$0xf]
      %v258 = vld [vmem:[%s224 + $0xc8] sm:$0xff]
      %v259 = vld [vmem:[%s224 + $0xd0] sm:$0xff]
      %v260 = vld [vmem:[%s224 + $0xd8] sm:$0xff]
      %v261 = vld [vmem:[%s224 + $0xe0] sm:$0xff]
      %v262 = vld [vmem:[%s224 + $0xe8] sm:$0xff]
      %v263 = vld [vmem:[%s224 + $0xf0] sm:$0xff]
      %v264 = vld [vmem:[%s224 + $0xf8] sm:$0xff]
      %v265 = vld [vmem:[%s224 + $0x100] sm:$0xff]
      %v266 = vld [vmem:[%s224 + $0x108] sm:$0xff]
      %v267 = vld [vmem:[%s224 + $0x110] sm:$0xff]
      %v268 = vld [vmem:[%s224 + $0x118] sm:$0xff]
      %v269 = vld [vmem:[%s224 + $0x120] sm:$0xff]
      %v270 = vld [vmem:[%s224 + $0x128] sm:$0xff]
      %v271 = vld [vmem:[%s224 + $0x130] sm:$0xff]
      %v272 = vld [vmem:[%s224 + $0x138] sm:$0xff]
      %v273 = vld [vmem:[%s224 + $0x140] sm:$0xff]
      %v274 = vld [vmem:[%s224 + $0x148] sm:$0xff]
      %v275 = vld [vmem:[%s224 + $0x150] sm:$0xff]
      %v276 = vld [vmem:[%s224 + $0x158] sm:$0xff]
      %v277 = vld [vmem:[%s224 + $0x160] sm:$0xff]
      %v278 = vld [vmem:[%s224 + $0x168] sm:$0xff]
      %v279 = vld [vmem:[%s224 + $0x170] sm:$0xff]
      %v280 = vld [vmem:[%s224 + $0x178] sm:$0xff]
      %v281 = vld [vmem:[%s224 + $0x180] sm:$0xff]
      %v282 = vld [vmem:[%s224 + $0x188] sm:$0xf]
      %v283 = vld [vmem:[%s224 + $0x190] sm:$0xff]
      %v284 = vld [vmem:[%s224 + $0x198] sm:$0xff]
      %v285 = vld [vmem:[%s224 + $0x1a0] sm:$0xff]
      %v286 = vld [vmem:[%s224 + $0x1a8] sm:$0xff]
      %v287 = vld [vmem:[%s224 + $0x1b0] sm:$0xff]
      %v288 = vld [vmem:[%s224 + $0x1b8] sm:$0xff]
      %v289 = vld [vmem:[%s224 + $0x1c0] sm:$0xff]
      %v290 = vld [vmem:[%s224 + $0x1c8] sm:$0xff]
      %v291 = vld [vmem:[%s224 + $0x1d0] sm:$0xff]
      %v292 = vld [vmem:[%s224 + $0x1d8] sm:$0xff]
      %v293 = vld [vmem:[%s224 + $0x1e0] sm:$0xff]
      %v294 = vld [vmem:[%s224 + $0x1e8] sm:$0xff]
      %v295 = vld [vmem:[%s224 + $0x1f0] sm:$0xff]
      %v296 = vld [vmem:[%s224 + $0x1f8] sm:$0xff]
      %v297 = vld [vmem:[%s224 + $0x200] sm:$0xff]
      %v298 = vld [vmem:[%s224 + $0x208] sm:$0xff]
      %v299 = vld [vmem:[%s224 + $0x210] sm:$0xff]
      %v300 = vld [vmem:[%s224 + $0x218] sm:$0xff]
      %v301 = vld [vmem:[%s224 + $0x220] sm:$0xff]
      %v302 = vld [vmem:[%s224 + $0x228] sm:$0xff]
      %v303 = vld [vmem:[%s224 + $0x230] sm:$0xff]
      %v304 = vld [vmem:[%s224 + $0x238] sm:$0xff]
      %v305 = vld [vmem:[%s224 + $0x240] sm:$0xff]
      %v306 = vld [vmem:[%s224 + $0x248] sm:$0xff]
      %v307 = vld [vmem:[%s224 + $0x250] sm:$0xf]
      %v308 = vld [vmem:[%s224 + $0x258] sm:$0xff]
      %v309 = vld [vmem:[%s224 + $0x260] sm:$0xff]
      %v310 = vld [vmem:[%s224 + $0x268] sm:$0xff]
      %v311 = vld [vmem:[%s224 + $0x270] sm:$0xff]
      %v312 = vld [vmem:[%s224 + $0x278] sm:$0xff]
      %v313 = vld [vmem:[%s224 + $0x280] sm:$0xff]
      %v314 = vld [vmem:[%s224 + $0x288] sm:$0xff]
      %v315 = vld [vmem:[%s224 + $0x290] sm:$0xff]
      %v316 = vld [vmem:[%s224 + $0x298] sm:$0xff]
      %v317 = vld [vmem:[%s224 + $0x2a0] sm:$0xff]
      %v318 = vld [vmem:[%s224 + $0x2a8] sm:$0xff]
      %v319 = vld [vmem:[%s224 + $0x2b0] sm:$0xff]
      %v320 = vld [vmem:[%s224 + $0x2b8] sm:$0xff]
      %v321 = vld [vmem:[%s224 + $0x2c0] sm:$0xff]
      %v322 = vld [vmem:[%s224 + $0x2c8] sm:$0xff]
      %v323 = vld [vmem:[%s224 + $0x2d0] sm:$0xff]
      %v324 = vld [vmem:[%s224 + $0x2d8] sm:$0xff]
      %v325 = vld [vmem:[%s224 + $0x2e0] sm:$0xff]
      %v326 = vld [vmem:[%s224 + $0x2e8] sm:$0xff]
      %v327 = vld [vmem:[%s224 + $0x2f0] sm:$0xff]
      %v328 = vld [vmem:[%s224 + $0x2f8] sm:$0xff]
      %v329 = vld [vmem:[%s224 + $0x300] sm:$0xff]
      %v330 = vld [vmem:[%s224 + $0x308] sm:$0xff]
      %v331 = vld [vmem:[%s224 + $0x310] sm:$0xff]
      %v332 = vld [vmem:[%s224 + $0x318] sm:$0xf]
      %v333 = vadd.f32 %v233, %v234
      %v334 = vadd.f32 %v333, %v235
      %v335 = vadd.f32 %v334, %v236
      %v336 = vadd.f32 %v335, %v237
      %v337 = vadd.f32 %v336, %v238
      %v338 = vadd.f32 %v337, %v239
      %v339 = vadd.f32 %v338, %v240
      %v340 = vadd.f32 %v339, %v241
      %v341 = vadd.f32 %v340, %v242
      %v342 = vadd.f32 %v341, %v243
      %v343 = vadd.f32 %v342, %v244
      %v344 = vadd.f32 %v343, %v245
      %v345 = vadd.f32 %v344, %v246
      %v346 = vadd.f32 %v345, %v247
      %v347 = vadd.f32 %v346, %v248
      %v348 = vadd.f32 %v347, %v249
      %v349 = vadd.f32 %v348, %v250
      %v350 = vadd.f32 %v349, %v251
      %v351 = vadd.f32 %v350, %v252
      %v352 = vadd.f32 %v351, %v253
      %v353 = vadd.f32 %v352, %v254
      %v354 = vadd.f32 %v353, %v255
      %v355 = vadd.f32 %v354, %v256
      %vm356 = vcmask 1043456
      %v357 = vsel %vm356, %v257, 0.0
      %v358 = vadd.f32 %v355, %v357
      %v359 = vrot.slane %v358, 4
      %v360 = vadd.f32 %v358, %v359
      %v361 = vrot.slane %v360, 2
      %v362 = vadd.f32 %v360, %v361
      %v363 = vrot.slane %v362, 1
      %v364 = vadd.f32 %v362, %v363
      %v365 = vadd.f32 %v258, %v259
      %v366 = vadd.f32 %v365, %v260
      %v367 = vadd.f32 %v366, %v261
      %v368 = vadd.f32 %v367, %v262
      %v369 = vadd.f32 %v368, %v263
      %v370 = vadd.f32 %v369, %v264
      %v371 = vadd.f32 %v370, %v265
      %v372 = vadd.f32 %v371, %v266
      %v373 = vadd.f32 %v372, %v267
      %v374 = vadd.f32 %v373, %v268
      %v375 = vadd.f32 %v374, %v269
      %v376 = vadd.f32 %v375, %v270
      %v377 = vadd.f32 %v376, %v271
      %v378 = vadd.f32 %v377, %v272
      %v379 = vadd.f32 %v378, %v273
      %v380 = vadd.f32 %v379, %v274
      %v381 = vadd.f32 %v380, %v275
      %v382 = vadd.f32 %v381, %v276
      %v383 = vadd.f32 %v382, %v277
      %v384 = vadd.f32 %v383, %v278
      %v385 = vadd.f32 %v384, %v279
      %v386 = vadd.f32 %v385, %v280
      %v387 = vadd.f32 %v386, %v281
      %v388 = vsel %vm356, %v282, 0.0
      %v389 = vadd.f32 %v387, %v388
      %v390 = vrot.slane %v389, 4
      %v391 = vadd.f32 %v389, %v390
      %v392 = vrot.slane %v391, 2
      %v393 = vadd.f32 %v391, %v392
      %v394 = vrot.slane %v393, 1
      %v395 = vadd.f32 %v393, %v394
      %v396 = vadd.f32 %v283, %v284
      %v397 = vadd.f32 %v396, %v285
      %v398 = vadd.f32 %v397, %v286
      %v399 = vadd.f32 %v398, %v287
      %v400 = vadd.f32 %v399, %v288
      %v401 = vadd.f32 %v400, %v289
      %v402 = vadd.f32 %v401, %v290
      %v403 = vadd.f32 %v402, %v291
      %v404 = vadd.f32 %v403, %v292
      %v405 = vadd.f32 %v404, %v293
      %v406 = vadd.f32 %v405, %v294
      %v407 = vadd.f32 %v406, %v295
      %v408 = vadd.f32 %v407, %v296
      %v409 = vadd.f32 %v408, %v297
      %v410 = vadd.f32 %v409, %v298
      %v411 = vadd.f32 %v410, %v299
      %v412 = vadd.f32 %v411, %v300
      %v413 = vadd.f32 %v412, %v301
      %v414 = vadd.f32 %v413, %v302
      %v415 = vadd.f32 %v414, %v303
      %v416 = vadd.f32 %v415, %v304
      %v417 = vadd.f32 %v416, %v305
      %v418 = vadd.f32 %v417, %v306
      %v419 = vsel %vm356, %v307, 0.0
      %v420 = vadd.f32 %v418, %v419
      %v421 = vrot.slane %v420, 4
      %v422 = vadd.f32 %v420, %v421
      %v423 = vrot.slane %v422, 2
      %v424 = vadd.f32 %v422, %v423
      %v425 = vrot.slane %v424, 1
      %v426 = vadd.f32 %v424, %v425
      %v427 = vadd.f32 %v308, %v309
      %v428 = vadd.f32 %v427, %v310
      %v429 = vadd.f32 %v428, %v311
      %v430 = vadd.f32 %v429, %v312
      %v431 = vadd.f32 %v430, %v313
      %v432 = vadd.f32 %v431, %v314
      %v433 = vadd.f32 %v432, %v315
      %v434 = vadd.f32 %v433, %v316
      %v435 = vadd.f32 %v434, %v317
      %v436 = vadd.f32 %v435, %v318
      %v437 = vadd.f32 %v436, %v319
      %v438 = vadd.f32 %v437, %v320
      %v439 = vadd.f32 %v438, %v321
      %v440 = vadd.f32 %v439, %v322
      %v441 = vadd.f32 %v440, %v323
      %v442 = vadd.f32 %v441, %v324
      %v443 = vadd.f32 %v442, %v325
      %v444 = vadd.f32 %v443, %v326
      %v445 = vadd.f32 %v444, %v327
      %v446 = vadd.f32 %v445, %v328
      %v447 = vadd.f32 %v446, %v329
      %v448 = vadd.f32 %v447, %v330
      %v449 = vadd.f32 %v448, %v331
      %v450 = vsel %vm356, %v332, 0.0
      %v451 = vadd.f32 %v449, %v450
      %v452 = vrot.slane %v451, 4
      %v453 = vadd.f32 %v451, %v452
      %v454 = vrot.slane %v453, 2
      %v455 = vadd.f32 %v453, %v454
      %v456 = vrot.slane %v455, 1
      %v457 = vadd.f32 %v455, %v456
      %v458 = vmul.f32 %v364, 0.0051020407
      %v459 = vmul.f32 %v395, 0.0051020407
      %v460 = vmul.f32 %v426, 0.0051020407
      %v461 = vmul.f32 %v457, 0.0051020407
      %v462 = vld [vmem:[%s1] sm:$0xff]
      %v463 = vld [vmem:[%s1 + $0x8] sm:$0xff]
      %v464 = vld [vmem:[%s1 + $0x10] sm:$0xff]
      %v465 = vld [vmem:[%s1 + $0x18] sm:$0xff]
      %v466 = vld [vmem:[%s1 + $0x20] sm:$0xff]
      %v467 = vld [vmem:[%s1 + $0x28] sm:$0xff]
      %v468 = vld [vmem:[%s1 + $0x30] sm:$0xff]
      %v469 = vld [vmem:[%s1 + $0x38] sm:$0xff]
      %v470 = vld [vmem:[%s1 + $0x40] sm:$0xff]
      %v471 = vld [vmem:[%s1 + $0x48] sm:$0xff]
      %v472 = vld [vmem:[%s1 + $0x50] sm:$0xff]
      %v473 = vld [vmem:[%s1 + $0x58] sm:$0xff]
      %v474 = vld [vmem:[%s1 + $0x60] sm:$0xff]
      %v475 = vld [vmem:[%s1 + $0x68] sm:$0xff]
      %v476 = vld [vmem:[%s1 + $0x70] sm:$0xff]
      %v477 = vld [vmem:[%s1 + $0x78] sm:$0xff]
      %v478 = vld [vmem:[%s2] sm:$0x1]
      %v480 = vlaneseq
      %v481 = vshrl.u32 %v480, 7
      %v482 = vsub.s32 0, %v481
      %v483 = vrot.slane %v478, %v482
      %vm489 = vcmask 1041409
      %v490 = vsel %vm489, %v459, %v458
      %vm491 = vcmask 1042434
      %v492 = vsel %vm491, %v460, %v490
      %vm493 = vcmask 1043459
      %v494 = vsel %vm493, %v461, %v492
      %496 = vmatprep.subr.mxu0 0.0
      %497 = vmatpush1.msra.mxu0 %v462
      %498 = vmatprep.subr.mxu0 0.0
      %499 = vmatpush1.msra.mxu0 %v463
      %500 = vmatprep.subr.mxu0 0.0
      %501 = vmatpush1.msra.mxu0 %v464
      %502 = vmatprep.subr.mxu0 0.0
      %503 = vmatpush1.msra.mxu0 %v465
      %504 = vmatprep.subr.mxu0 0.0
      %505 = vmatpush1.msra.mxu0 %v466
      %506 = vmatprep.subr.mxu0 0.0
      %507 = vmatpush1.msra.mxu0 %v467
      %508 = vmatprep.subr.mxu0 0.0
      %509 = vmatpush1.msra.mxu0 %v468
      %510 = vmatprep.subr.mxu0 0.0
      %511 = vmatpush1.msra.mxu0 %v469
      %512 = vmatprep.subr.mxu0 0.0
      %513 = vmatpush1.msra.mxu0 %v470
      %514 = vmatprep.subr.mxu0 0.0
      %515 = vmatpush1.msra.mxu0 %v471
      %516 = vmatprep.subr.mxu0 0.0
      %517 = vmatpush1.msra.mxu0 %v472
      %518 = vmatprep.subr.mxu0 0.0
      %519 = vmatpush1.msra.mxu0 %v473
      %520 = vmatprep.subr.mxu0 0.0
      %521 = vmatpush1.msra.mxu0 %v474
      %522 = vmatprep.subr.mxu0 0.0
      %523 = vmatpush1.msra.mxu0 %v475
      %524 = vmatprep.subr.mxu0 0.0
      %525 = vmatpush1.msra.mxu0 %v476
      %526 = vmatprep.subr.mxu0 0.0
      %527 = vmatpush1.msra.mxu0 %v477
      %528 = vmatprep.subr.mxu0 0.0
      %529 = vmatpush1.msra.mxu0 0.0
      %530 = vmatprep.subr.mxu0 0.0
      %531 = vmatpush1.msra.mxu0 0.0
      %532 = vmatprep.subr.mxu0 0.0
      %533 = vmatpush1.msra.mxu0 0.0
      %534 = vmatprep.subr.mxu0 0.0
      %535 = vmatpush1.msra.mxu0 0.0
      %536 = vmatprep.subr.mxu0 0.0
      %537 = vmatpush1.msra.mxu0 0.0
      %538 = vmatprep.subr.mxu0 0.0
      %539 = vmatpush1.msra.mxu0 0.0
      %540 = vmatprep.subr.mxu0 0.0
      %541 = vmatpush1.msra.mxu0 0.0
      %542 = vmatprep.subr.mxu0 0.0
      %543 = vmatpush1.msra.mxu0 0.0
      %544 = vmatprep.subr.mxu0 0.0
      %545 = vmatpush1.msra.mxu0 0.0
      %546 = vmatprep.subr.mxu0 0.0
      %547 = vmatpush1.msra.mxu0 0.0
      %548 = vmatprep.subr.mxu0 0.0
      %549 = vmatpush1.msra.mxu0 0.0
      %550 = vmatprep.subr.mxu0 0.0
      %551 = vmatpush1.msra.mxu0 0.0
      %552 = vmatprep.subr.mxu0 0.0
      %553 = vmatpush1.msra.mxu0 0.0
      %554 = vmatprep.subr.mxu0 0.0
      %555 = vmatpush1.msra.mxu0 0.0
      %556 = vmatprep.subr.mxu0 0.0
      %557 = vmatpush1.msra.mxu0 0.0
      %558 = vmatprep.subr.mxu0 0.0
      %559 = vmatpush1.msra.mxu0 0.0
      %560 = vmatprep.mubr.f32.mxu0 0.0
      %561 = vmatmul.mubr.f32.gmra.mrb[0].mxu0 %v494
      %v562 = vpop.f32.mrb[0].mxu0
      %v563 = vadd.f32 %v483, %v562
      %v564 = vpop.f32.mrb[0].mxu0
      %565 = vdwg.mxu0
      %v566 = vxor.u32 %v563, 2147483648
      %v567 = vmul.f32 %v566, 1.442695
      %v568 = vpow.pop %v567
      %v569 = vadd.f32 %v568, 1.0
      %v570 = vrcp.pop %v569
      %v571 = vmul.f32 1.0, %v570
      %v572 = vmul.f32 %v563, %v571
      %v573 = vld [vmem:[%s3] sm:$0xff]
      %v574 = vld [vmem:[%s4] sm:$0x1]
      %v576 = vlaneseq
      %v577 = vshrl.u32 %v576, 7
      %v578 = vsub.s32 0, %v577
      %v579 = vrot.slane %v574, %v578
      %vm581 = vcmask 64512
      %v583 = vsel %vm581, %v572, 0
      %585 = vmatprep.subr.mxu0 0.0
      %586 = vmatpush1.msra.mxu0 %v573
      %587 = vmatprep.subr.mxu0 0.0
      %588 = vmatpush1.msra.mxu0 0.0
      %589 = vmatprep.subr.mxu0 0.0
      %590 = vmatpush1.msra.mxu0 0.0
      %591 = vmatprep.subr.mxu0 0.0
      %592 = vmatpush1.msra.mxu0 0.0
      %593 = vmatprep.subr.mxu0 0.0
      %594 = vmatpush1.msra.mxu0 0.0
      %595 = vmatprep.subr.mxu0 0.0
      %596 = vmatpush1.msra.mxu0 0.0
      %597 = vmatprep.subr.mxu0 0.0
      %598 = vmatpush1.msra.mxu0 0.0
      %599 = vmatprep.subr.mxu0 0.0
      %600 = vmatpush1.msra.mxu0 0.0
      %601 = vmatprep.subr.mxu0 0.0
      %602 = vmatpush1.msra.mxu0 0.0
      %603 = vmatprep.subr.mxu0 0.0
      %604 = vmatpush1.msra.mxu0 0.0
      %605 = vmatprep.subr.mxu0 0.0
      %606 = vmatpush1.msra.mxu0 0.0
      %607 = vmatprep.subr.mxu0 0.0
      %608 = vmatpush1.msra.mxu0 0.0
      %609 = vmatprep.subr.mxu0 0.0
      %610 = vmatpush1.msra.mxu0 0.0
      %611 = vmatprep.subr.mxu0 0.0
      %612 = vmatpush1.msra.mxu0 0.0
      %613 = vmatprep.subr.mxu0 0.0
      %614 = vmatpush1.msra.mxu0 0.0
      %615 = vmatprep.subr.mxu0 0.0
      %616 = vmatpush1.msra.mxu0 0.0
      %617 = vmatprep.subr.mxu0 0.0
      %618 = vmatpush1.msra.mxu0 0.0
      %619 = vmatprep.subr.mxu0 0.0
      %620 = vmatpush1.msra.mxu0 0.0
      %621 = vmatprep.subr.mxu0 0.0
      %622 = vmatpush1.msra.mxu0 0.0
      %623 = vmatprep.subr.mxu0 0.0
      %624 = vmatpush1.msra.mxu0 0.0
      %625 = vmatprep.subr.mxu0 0.0
      %626 = vmatpush1.msra.mxu0 0.0
      %627 = vmatprep.subr.mxu0 0.0
      %628 = vmatpush1.msra.mxu0 0.0
      %629 = vmatprep.subr.mxu0 0.0
      %630 = vmatpush1.msra.mxu0 0.0
      %631 = vmatprep.subr.mxu0 0.0
      %632 = vmatpush1.msra.mxu0 0.0
      %633 = vmatprep.subr.mxu0 0.0
      %634 = vmatpush1.msra.mxu0 0.0
      %635 = vmatprep.subr.mxu0 0.0
      %636 = vmatpush1.msra.mxu0 0.0
      %637 = vmatprep.subr.mxu0 0.0
      %638 = vmatpush1.msra.mxu0 0.0
      %639 = vmatprep.subr.mxu0 0.0
      %640 = vmatpush1.msra.mxu0 0.0
      %641 = vmatprep.subr.mxu0 0.0
      %642 = vmatpush1.msra.mxu0 0.0
      %643 = vmatprep.subr.mxu0 0.0
      %644 = vmatpush1.msra.mxu0 0.0
      %645 = vmatprep.subr.mxu0 0.0
      %646 = vmatpush1.msra.mxu0 0.0
      %647 = vmatprep.subr.mxu0 0.0
      %648 = vmatpush1.msra.mxu0 0.0
      %649 = vmatprep.mubr.f32.mxu0 0.0
      %650 = vmatmul.mubr.f32.gmra.mrb[0].mxu0 %v583
      %v651 = vpop.f32.mrb[0].mxu0
      %v652 = vadd.f32 %v579, %v651
      %v653 = vpop.f32.mrb[0].mxu0
      %654 = vdwg.mxu0
      %v655 = vxor.u32 %v652, 2147483648
      %v656 = vmul.f32 %v655, 1.442695
      %v657 = vpow.pop %v656
      %v658 = vadd.f32 %v657, 1.0
      %v659 = vrcp.pop %v658
      %v660 = vmul.f32 1.0, %v659
      %v663 = vunpack.c.l.s4 1966171168
      %v664 = vunpack.c.0.s8 %v663
      %v665 = vlaneseq
      %v666 = vshrl.u32 %v665, 7
      %v667 = vsub.s32 %v664, %v666
      %v668 = vrot.slane %v660, %v667
      %v669 = vcombine.high %v668, %v668
      %v671 = vunpack.c.l.s4 1966171168
      %v672 = vunpack.c.0.s8 %v671
      %v673 = vlaneseq
      %v674 = vshrl.u32 %v673, 7
      %v675 = vsub.s32 %v672, %v674
      %v676 = vrot.slane %v668, %v675
      %v678 = vunpack.c.l.s4 1966171168
      %v679 = vunpack.c.0.s8 %v678
      %v680 = vlaneseq
      %v681 = vshrl.u32 %v680, 7
      %v682 = vsub.s32 %v679, %v681
      %v683 = vrot.slane %v669, %v682
      %v684 = vcombine.high %v676, %v676
      %v685 = vcombine.high %v683, %v683
      %v686 = vlaneseq
      %v687 = vshrl.u32 %v686, 7
      %v688 = vsub.s32 0, %v687
      %v689 = vrot.slane %v676, %v688
      %v690 = vlaneseq
      %v691 = vshrl.u32 %v690, 7
      %v692 = vsub.s32 0, %v691
      %v693 = vrot.slane %v683, %v692
      %v694 = vlaneseq
      %v695 = vshrl.u32 %v694, 7
      %v696 = vsub.s32 0, %v695
      %v697 = vrot.slane %v684, %v696
      %v698 = vlaneseq
      %v699 = vshrl.u32 %v698, 7
      %v700 = vsub.s32 0, %v699
      %v701 = vrot.slane %v685, %v700
      %v706 = vmul.f32 %v233, %v689
      %v707 = vmul.f32 %v234, %v689
      %v708 = vmul.f32 %v235, %v689
      %v709 = vmul.f32 %v236, %v689
      %v710 = vmul.f32 %v237, %v689
      %v711 = vmul.f32 %v238, %v689
      %v712 = vmul.f32 %v239, %v689
      %v713 = vmul.f32 %v240, %v689
      %v714 = vmul.f32 %v241, %v689
      %v715 = vmul.f32 %v242, %v689
      %v716 = vmul.f32 %v243, %v689
      %v717 = vmul.f32 %v244, %v689
      %v718 = vmul.f32 %v245, %v689
      %v719 = vmul.f32 %v246, %v689
      %v720 = vmul.f32 %v247, %v689
      %v721 = vmul.f32 %v248, %v689
      %v722 = vmul.f32 %v249, %v689
      %v723 = vmul.f32 %v250, %v689
      %v724 = vmul.f32 %v251, %v689
      %v725 = vmul.f32 %v252, %v689
      %v726 = vmul.f32 %v253, %v689
      %v727 = vmul.f32 %v254, %v689
      %v728 = vmul.f32 %v255, %v689
      %v729 = vmul.f32 %v256, %v689
      %v730 = vmul.f32 %v257, %v689
      %v731 = vmul.f32 %v258, %v693
      %v732 = vmul.f32 %v259, %v693
      %v733 = vmul.f32 %v260, %v693
      %v734 = vmul.f32 %v261, %v693
      %v735 = vmul.f32 %v262, %v693
      %v736 = vmul.f32 %v263, %v693
      %v737 = vmul.f32 %v264, %v693
      %v738 = vmul.f32 %v265, %v693
      %v739 = vmul.f32 %v266, %v693
      %v740 = vmul.f32 %v267, %v693
      %v741 = vmul.f32 %v268, %v693
      %v742 = vmul.f32 %v269, %v693
      %v743 = vmul.f32 %v270, %v693
      %v744 = vmul.f32 %v271, %v693
      %v745 = vmul.f32 %v272, %v693
      %v746 = vmul.f32 %v273, %v693
      %v747 = vmul.f32 %v274, %v693
      %v748 = vmul.f32 %v275, %v693
      %v749 = vmul.f32 %v276, %v693
      %v750 = vmul.f32 %v277, %v693
      %v751 = vmul.f32 %v278, %v693
      %v752 = vmul.f32 %v279, %v693
      %v753 = vmul.f32 %v280, %v693
      %v754 = vmul.f32 %v281, %v693
      %v755 = vmul.f32 %v282, %v693
      %v756 = vmul.f32 %v283, %v697
      %v757 = vmul.f32 %v284, %v697
      %v758 = vmul.f32 %v285, %v697
      %v759 = vmul.f32 %v286, %v697
      %v760 = vmul.f32 %v287, %v697
      %v761 = vmul.f32 %v288, %v697
      %v762 = vmul.f32 %v289, %v697
      %v763 = vmul.f32 %v290, %v697
      %v764 = vmul.f32 %v291, %v697
      %v765 = vmul.f32 %v292, %v697
      %v766 = vmul.f32 %v293, %v697
      %v767 = vmul.f32 %v294, %v697
      %v768 = vmul.f32 %v295, %v697
      %v769 = vmul.f32 %v296, %v697
      %v770 = vmul.f32 %v297, %v697
      %v771 = vmul.f32 %v298, %v697
      %v772 = vmul.f32 %v299, %v697
      %v773 = vmul.f32 %v300, %v697
      %v774 = vmul.f32 %v301, %v697
      %v775 = vmul.f32 %v302, %v697
      %v776 = vmul.f32 %v303, %v697
      %v777 = vmul.f32 %v304, %v697
      %v778 = vmul.f32 %v305, %v697
      %v779 = vmul.f32 %v306, %v697
      %v780 = vmul.f32 %v307, %v697
      %v781 = vmul.f32 %v308, %v701
      %v782 = vmul.f32 %v309, %v701
      %v783 = vmul.f32 %v310, %v701
      %v784 = vmul.f32 %v311, %v701
      %v785 = vmul.f32 %v312, %v701
      %v786 = vmul.f32 %v313, %v701
      %v787 = vmul.f32 %v314, %v701
      %v788 = vmul.f32 %v315, %v701
      %v789 = vmul.f32 %v316, %v701
      %v790 = vmul.f32 %v317, %v701
      %v791 = vmul.f32 %v318, %v701
      %v792 = vmul.f32 %v319, %v701
      %v793 = vmul.f32 %v320, %v701
      %v794 = vmul.f32 %v321, %v701
      %v795 = vmul.f32 %v322, %v701
      %v796 = vmul.f32 %v323, %v701
      %v797 = vmul.f32 %v324, %v701
      %v798 = vmul.f32 %v325, %v701
      %v799 = vmul.f32 %v326, %v701
      %v800 = vmul.f32 %v327, %v701
      %v801 = vmul.f32 %v328, %v701
      %v802 = vmul.f32 %v329, %v701
      %v803 = vmul.f32 %v330, %v701
      %v804 = vmul.f32 %v331, %v701
      %v805 = vmul.f32 %v332, %v701
      %806 = vst [vmem:[%s231] sm:$0xff] %v706
      %807 = vst [vmem:[%s231 + $0x8] sm:$0xff] %v707
      %808 = vst [vmem:[%s231 + $0x10] sm:$0xff] %v708
      %809 = vst [vmem:[%s231 + $0x18] sm:$0xff] %v709
      %810 = vst [vmem:[%s231 + $0x20] sm:$0xff] %v710
      %811 = vst [vmem:[%s231 + $0x28] sm:$0xff] %v711
      %812 = vst [vmem:[%s231 + $0x30] sm:$0xff] %v712
      %813 = vst [vmem:[%s231 + $0x38] sm:$0xff] %v713
      %814 = vst [vmem:[%s231 + $0x40] sm:$0xff] %v714
      %815 = vst [vmem:[%s231 + $0x48] sm:$0xff] %v715
      %816 = vst [vmem:[%s231 + $0x50] sm:$0xff] %v716
      %817 = vst [vmem:[%s231 + $0x58] sm:$0xff] %v717
      %818 = vst [vmem:[%s231 + $0x60] sm:$0xff] %v718
      %819 = vst [vmem:[%s231 + $0x68] sm:$0xff] %v719
      %820 = vst [vmem:[%s231 + $0x70] sm:$0xff] %v720
      %821 = vst [vmem:[%s231 + $0x78] sm:$0xff] %v721
      %822 = vst [vmem:[%s231 + $0x80] sm:$0xff] %v722
      %823 = vst [vmem:[%s231 + $0x88] sm:$0xff] %v723
      %824 = vst [vmem:[%s231 + $0x90] sm:$0xff] %v724
      %825 = vst [vmem:[%s231 + $0x98] sm:$0xff] %v725
      %826 = vst [vmem:[%s231 + $0xa0] sm:$0xff] %v726
      %827 = vst [vmem:[%s231 + $0xa8] sm:$0xff] %v727
      %828 = vst [vmem:[%s231 + $0xb0] sm:$0xff] %v728
      %829 = vst [vmem:[%s231 + $0xb8] sm:$0xff] %v729
      %830 = vst [vmem:[%s231 + $0xc0] sm:$0xf] %v730
      %831 = vst [vmem:[%s231 + $0xc8] sm:$0xff] %v731
      %832 = vst [vmem:[%s231 + $0xd0] sm:$0xff] %v732
      %833 = vst [vmem:[%s231 + $0xd8] sm:$0xff] %v733
      %834 = vst [vmem:[%s231 + $0xe0] sm:$0xff] %v734
      %835 = vst [vmem:[%s231 + $0xe8] sm:$0xff] %v735
      %836 = vst [vmem:[%s231 + $0xf0] sm:$0xff] %v736
      %837 = vst [vmem:[%s231 + $0xf8] sm:$0xff] %v737
      %838 = vst [vmem:[%s231 + $0x100] sm:$0xff] %v738
      %839 = vst [vmem:[%s231 + $0x108] sm:$0xff] %v739
      %840 = vst [vmem:[%s231 + $0x110] sm:$0xff] %v740
      %841 = vst [vmem:[%s231 + $0x118] sm:$0xff] %v741
      %842 = vst [vmem:[%s231 + $0x120] sm:$0xff] %v742
      %843 = vst [vmem:[%s231 + $0x128] sm:$0xff] %v743
      %844 = vst [vmem:[%s231 + $0x130] sm:$0xff] %v744
      %845 = vst [vmem:[%s231 + $0x138] sm:$0xff] %v745
      %846 = vst [vmem:[%s231 + $0x140] sm:$0xff] %v746
      %847 = vst [vmem:[%s231 + $0x148] sm:$0xff] %v747
      %848 = vst [vmem:[%s231 + $0x150] sm:$0xff] %v748
      %849 = vst [vmem:[%s231 + $0x158] sm:$0xff] %v749
      %850 = vst [vmem:[%s231 + $0x160] sm:$0xff] %v750
      %851 = vst [vmem:[%s231 + $0x168] sm:$0xff] %v751
      %852 = vst [vmem:[%s231 + $0x170] sm:$0xff] %v752
      %853 = vst [vmem:[%s231 + $0x178] sm:$0xff] %v753
      %854 = vst [vmem:[%s231 + $0x180] sm:$0xff] %v754
      %855 = vst [vmem:[%s231 + $0x188] sm:$0xf] %v755
      %856 = vst [vmem:[%s231 + $0x190] sm:$0xff] %v756
      %857 = vst [vmem:[%s231 + $0x198] sm:$0xff] %v757
      %858 = vst [vmem:[%s231 + $0x1a0] sm:$0xff] %v758
      %859 = vst [vmem:[%s231 + $0x1a8] sm:$0xff] %v759
      %860 = vst [vmem:[%s231 + $0x1b0] sm:$0xff] %v760
      %861 = vst [vmem:[%s231 + $0x1b8] sm:$0xff] %v761
      %862 = vst [vmem:[%s231 + $0x1c0] sm:$0xff] %v762
      %863 = vst [vmem:[%s231 + $0x1c8] sm:$0xff] %v763
      %864 = vst [vmem:[%s231 + $0x1d0] sm:$0xff] %v764
      %865 = vst [vmem:[%s231 + $0x1d8] sm:$0xff] %v765
      %866 = vst [vmem:[%s231 + $0x1e0] sm:$0xff] %v766
      %867 = vst [vmem:[%s231 + $0x1e8] sm:$0xff] %v767
      %868 = vst [vmem:[%s231 + $0x1f0] sm:$0xff] %v768
      %869 = vst [vmem:[%s231 + $0x1f8] sm:$0xff] %v769
      %870 = vst [vmem:[%s231 + $0x200] sm:$0xff] %v770
      %871 = vst [vmem:[%s231 + $0x208] sm:$0xff] %v771
      %872 = vst [vmem:[%s231 + $0x210] sm:$0xff] %v772
      %873 = vst [vmem:[%s231 + $0x218] sm:$0xff] %v773
      %874 = vst [vmem:[%s231 + $0x220] sm:$0xff] %v774
      %875 = vst [vmem:[%s231 + $0x228] sm:$0xff] %v775
      %876 = vst [vmem:[%s231 + $0x230] sm:$0xff] %v776
      %877 = vst [vmem:[%s231 + $0x238] sm:$0xff] %v777
      %878 = vst [vmem:[%s231 + $0x240] sm:$0xff] %v778
      %879 = vst [vmem:[%s231 + $0x248] sm:$0xff] %v779
      %880 = vst [vmem:[%s231 + $0x250] sm:$0xf] %v780
      %881 = vst [vmem:[%s231 + $0x258] sm:$0xff] %v781
      %882 = vst [vmem:[%s231 + $0x260] sm:$0xff] %v782
      %883 = vst [vmem:[%s231 + $0x268] sm:$0xff] %v783
      %884 = vst [vmem:[%s231 + $0x270] sm:$0xff] %v784
      %885 = vst [vmem:[%s231 + $0x278] sm:$0xff] %v785
      %886 = vst [vmem:[%s231 + $0x280] sm:$0xff] %v786
      %887 = vst [vmem:[%s231 + $0x288] sm:$0xff] %v787
      %888 = vst [vmem:[%s231 + $0x290] sm:$0xff] %v788
      %889 = vst [vmem:[%s231 + $0x298] sm:$0xff] %v789
      %890 = vst [vmem:[%s231 + $0x2a0] sm:$0xff] %v790
      %891 = vst [vmem:[%s231 + $0x2a8] sm:$0xff] %v791
      %892 = vst [vmem:[%s231 + $0x2b0] sm:$0xff] %v792
      %893 = vst [vmem:[%s231 + $0x2b8] sm:$0xff] %v793
      %894 = vst [vmem:[%s231 + $0x2c0] sm:$0xff] %v794
      %895 = vst [vmem:[%s231 + $0x2c8] sm:$0xff] %v795
      %896 = vst [vmem:[%s231 + $0x2d0] sm:$0xff] %v796
      %897 = vst [vmem:[%s231 + $0x2d8] sm:$0xff] %v797
      %898 = vst [vmem:[%s231 + $0x2e0] sm:$0xff] %v798
      %899 = vst [vmem:[%s231 + $0x2e8] sm:$0xff] %v799
      %900 = vst [vmem:[%s231 + $0x2f0] sm:$0xff] %v800
      %901 = vst [vmem:[%s231 + $0x2f8] sm:$0xff] %v801
      %902 = vst [vmem:[%s231 + $0x300] sm:$0xff] %v802
      %903 = vst [vmem:[%s231 + $0x308] sm:$0xff] %v803
      %904 = vst [vmem:[%s231 + $0x310] sm:$0xff] %v804
      %905 = vst [vmem:[%s231 + $0x318] sm:$0xf] %v805
      %s906 = smul.u32 4, %s16
      %p907 = scmp.lt.s32.totalorder %s906, 7
      %s908 = scalar_select %p907, %s906, 7
      %s909 = smul.addr %s908, 25
      %s910 = smul.addr %s909, 8
      %s911 = scalar_lea.vmem %s5, %s910
      // Predicated region
      $region41: #{tpu_custom_call.1} parent=39 // pred_check
        %p912 = pneg %p144
      $region42: #{tpu_custom_call.1} parent=39 // pred_check_branch
        %914 = sbr.rel (%p912) target = $region44
      $region43: #{tpu_custom_call.1} parent=39 // pred_region
        %s915 = smul.u32 4, %s16
      $region44: #{tpu_custom_call.1} parent=39 // pred_fallthru
        _
    $region40: #{tpu_custom_call.1} parent=5 // pred_fallthru
      _
    %p916 = scmp.le.s32.totalorder 2, %s11
    // Predicated region
    $region45: #{tpu_custom_call.1} parent=5 // pred_check
      %p917 = pneg %p916
    $region46: #{tpu_custom_call.1} parent=5 // pred_check_branch
      %919 = sbr.rel (%p917) target = $region48
    $region47: #{tpu_custom_call.1} parent=5 // pred_region
      %s920 = ssub.s32 %s11, 2
      // Predicated region
      $region49: #{tpu_custom_call.1} parent=47 // pred_check
        %p921 = pneg %p150
      $region50: #{tpu_custom_call.1} parent=47 // pred_check_branch
        %923 = sbr.rel (%p921) target = $region52
      $region51: #{tpu_custom_call.1} parent=47 // pred_region
        %s924 = smul.u32 4, %s17
        %p925 = scmp.lt.s32.totalorder %s924, 7
        %s926 = scalar_select %p925, %s924, 7
        %s927 = smul.addr %s926, 25
        %s928 = smul.addr %s927, 8
        %s929 = scalar_lea.vmem %s5, %s928
      $region52: #{tpu_custom_call.1} parent=47 // pred_fallthru
        _
    $region48: #{tpu_custom_call.1} parent=5 // pred_fallthru
      _
  $region6: #{tpu_custom_call.1} parent=0 // loop_footer
    %s15 = sadd.s32 1, %s11
  $region7: #{tpu_custom_call.1} parent=0 // loop_footer_branch
    %10 = sbr.rel target = $region3
  $region8: #{tpu_custom_call.1} parent=0 // loop_exit
    _

</llo_original>
